<compile_context>
chip_gen: v6e
topology: v6e:2x2x1
jax: 0.10.0
libtpu: 0.0.40
codegen_flags: <defaults>
</compile_context>

<pallas_src>
import functools

import jax
import jax.numpy as jnp
from jax.experimental import pallas as pl
from jax.experimental.pallas import tpu as pltpu


def _gauss_norm_kernel(x_ref, w_ref, b_ref, loc_ref, scale_ref, *, c_out):
    """One row-tile of the fused GaussNorm head.

    x_ref:     (TM, c_in)       row tile (batch*nodes flattened onto sublanes)
    w_ref:     (c_in, 2*c_out)  n_conv | p_conv 1x1-conv weights packed on lanes
    b_ref:     (1, 2*c_out)     packed biases
    loc_ref:   (TM, c_out)      softplus(n_conv(x))
    scale_ref: (TM, c_out)      sigmoid(p_conv(x))
    """
    # Single packed MXU matmul for both 1x1 convolutions (lane-dense N = 2*c_out).
    z = jnp.dot(x_ref[...], w_ref[...], preferred_element_type=jnp.float32) + b_ref[...]
    zn = z[:, :c_out]   # n_conv half -> softplus
    zp = z[:, c_out:]   # p_conv half -> sigmoid

    # Numerically stable softplus: max(z,0) + log(1 + exp(-|z|)).
    en = jnp.exp(-jnp.abs(zn))
    loc_ref[...] = jnp.maximum(zn, 0.0) + jnp.log(1.0 + en)

    # Stable sigmoid from the same exp(-|z|) form:
    #   sigmoid(z) = 1/(1+e) for z>=0,  e/(1+e) for z<0,  with e = exp(-|z|).
    # Exact reciprocal (approx=True dropped per review).
    ep = jnp.exp(-jnp.abs(zp))
    scale_ref[...] = jnp.where(zp >= 0.0, 1.0, ep) * pl.reciprocal(1.0 + ep)


def pack_gauss_norm_params(wn, bn, wp, bp):
    """Pack PyTorch-layout conv params once (hoisted out of the per-step forward).

    wn/wp: (c_out, c_in, 1, 1) conv weights; bn/bp: (c_out,) biases.
    Returns {"w_packed": (c_in, 2*c_out), "b_packed": (1, 2*c_out)}.
    """
    c_out = wn.shape[0]
    w_packed = jnp.concatenate([wn[:, :, 0, 0].T, wp[:, :, 0, 0].T], axis=1)
    b_packed = jnp.concatenate([bn, bp]).reshape(1, 2 * c_out)
    return {"w_packed": w_packed, "b_packed": b_packed}


def gauss_norm_forward(packed, x, *, tm=1024):
    """JAX/Pallas equivalent of GaussNorm.forward.

    packed: output of pack_gauss_norm_params.
    x: (B, N, c_in, 1) float32.
    Returns (loc, scale), each (B, N, c_out).
    """
    w_packed, b_packed = packed["w_packed"], packed["b_packed"]
    c_in = w_packed.shape[0]
    c_out = w_packed.shape[1] // 2
    B, N = x.shape[0], x.shape[1]
    M = B * N

    # Drop the trailing singleton; flatten batch*nodes onto sublanes (metadata-only reshape).
    x2d = x[..., 0].reshape(M, c_in)

    # Row tile: large enough for DMA/compute overlap at big M, clamped (multiple of 8) for
    # tiny M.  Per-tile VMEM (double-buffered, lane-padded) stays a few MiB at TM=1024, well
    # inside the 16/32 MiB scoped defaults of v5e/v6e/v7x.
    tm = min(tm, max(8, ((M + 7) // 8) * 8))
    grid_m = pl.cdiv(M, tm)
    m_pad = grid_m * tm
    if m_pad != M:
        x2d = jnp.pad(x2d, ((0, m_pad - M), (0, 0)))

    cost = pl.CostEstimate(
        flops=2 * m_pad * c_in * (2 * c_out),
        transcendentals=4 * m_pad * c_out,  # exp+log (loc half), exp+recip (scale half)
        bytes_accessed=4 * (m_pad * c_in + 2 * m_pad * c_out + c_in * 2 * c_out + 2 * c_out),
    )

    loc2d, scale2d = pl.pallas_call(
        functools.partial(_gauss_norm_kernel, c_out=c_out),
        grid=(grid_m,),
        in_specs=[
            pl.BlockSpec((tm, c_in), lambda i: (i, 0)),          # row tile of x
            pl.BlockSpec((c_in, 2 * c_out), lambda i: (0, 0)),   # packed weights, pinned
            pl.BlockSpec((1, 2 * c_out), lambda i: (0, 0)),      # packed bias, pinned
        ],
        out_specs=(
            pl.BlockSpec((tm, c_out), lambda i: (i, 0)),
            pl.BlockSpec((tm, c_out), lambda i: (i, 0)),
        ),
        out_shape=(
            jax.ShapeDtypeStruct((m_pad, c_out), jnp.float32),
            jax.ShapeDtypeStruct((m_pad, c_out), jnp.float32),
        ),
        compiler_params=pltpu.CompilerParams(dimension_semantics=("parallel",)),
        cost_estimate=cost,
    )(x2d, w_packed, b_packed)

    loc = loc2d[:M].reshape(B, N, c_out)
    scale = scale2d[:M].reshape(B, N, c_out)
    return loc, scale


if __name__ == "__main__":
    # x: (batch, num_nodes, c_in, 1); 2*c_out == 128 -> one lane-dense MXU output width.
    B, N, c_in, c_out = 2, 16, 32, 64

    key = jax.random.PRNGKey(0)
    kx, k1, k2, k3, k4 = jax.random.split(key, 5)

    x = jax.random.normal(kx, (B, N, c_in, 1), jnp.float32)
    # PyTorch conv-layout parameters.
    wn = 0.1 * jax.random.normal(k1, (c_out, c_in, 1, 1), jnp.float32)
    bn = 0.1 * jax.random.normal(k2, (c_out,), jnp.float32)
    wp = 0.1 * jax.random.normal(k3, (c_out, c_in, 1, 1), jnp.float32)
    bp = 0.1 * jax.random.normal(k4, (c_out,), jnp.float32)

    # Pack once (outside the per-step jit).
    packed = pack_gauss_norm_params(wn, bn, wp, bp)

    fwd = jax.jit(gauss_norm_forward)
    loc, scale = fwd(packed, x)
    jax.block_until_ready((loc, scale))

    # Plain-XLA reference for a correctness check.
    x2d = x[..., 0].reshape(B * N, c_in)
    loc_ref = jax.nn.softplus(x2d @ wn[:, :, 0, 0].T + bn).reshape(B, N, c_out)
    scale_ref = jax.nn.sigmoid(x2d @ wp[:, :, 0, 0].T + bp).reshape(B, N, c_out)

    assert loc.shape == (B, N, c_out) and scale.shape == (B, N, c_out)
    assert bool(jnp.all(jnp.isfinite(loc))) and bool(jnp.all(jnp.isfinite(scale)))
    assert bool(jnp.allclose(loc, loc_ref, atol=1e-5, rtol=1e-5))
    assert bool(jnp.allclose(scale, scale_ref, atol=1e-5, rtol=1e-5))
    print("KERNEL_OK")
</pallas_src>

<mosaic_0001>
module attributes {stable_mosaic.version = 11 : i64} {
  func.func @_gauss_norm_kernel(%arg0: i32, %arg1: memref<32x32xf32, #tpu.memory_space<vmem>>, %arg2: memref<32x128xf32, #tpu.memory_space<vmem>>, %arg3: memref<1x128xf32, #tpu.memory_space<vmem>>, %arg4: memref<32x64xf32, #tpu.memory_space<vmem>>, %arg5: memref<32x64xf32, #tpu.memory_space<vmem>>) attributes {dimension_semantics = [#tpu.dimension_semantics<parallel>], iteration_bounds = array<i64: 1>, scalar_prefetch = 0 : i64, scratch_operands = 0 : i64, tpu.core_type = #tpu.core_type<tc>, window_params = [{transform_indices = @transform_0, window_bounds = array<i64: 32, 32>}, {pipeline_mode = #tpu.pipeline_mode<synchronous>, transform_indices = @transform_1, window_bounds = array<i64: 32, 128>}, {pipeline_mode = #tpu.pipeline_mode<synchronous>, transform_indices = @transform_2, window_bounds = array<i64: 1, 128>}, {transform_indices = @transform_3, window_bounds = array<i64: 32, 64>}, {transform_indices = @transform_4, window_bounds = array<i64: 32, 64>}]} {
    %c0 = arith.constant 0 : index
    %c0_0 = arith.constant 0 : index
    %0 = vector.load %arg1[%c0, %c0_0] : memref<32x32xf32, #tpu.memory_space<vmem>>, vector<32x32xf32>
    %c0_1 = arith.constant 0 : index
    %c0_2 = arith.constant 0 : index
    %1 = vector.load %arg2[%c0_1, %c0_2] : memref<32x128xf32, #tpu.memory_space<vmem>>, vector<32x128xf32>
    %cst = arith.constant dense<0.000000e+00> : vector<32x128xf32>
    %2 = tpu.matmul %0, %1, %cst {dimension_numbers = #tpu.dot_dimension_numbers<[1], [0], [0], [1], [0, 0, 1, 1], [], []>} : vector<32x32xf32>, vector<32x128xf32>, vector<32x128xf32> -> vector<32x128xf32>
    %c0_3 = arith.constant 0 : index
    %c0_4 = arith.constant 0 : index
    %3 = vector.load %arg3[%c0_3, %c0_4] : memref<1x128xf32, #tpu.memory_space<vmem>>, vector<1x128xf32>
    %4 = vector.broadcast %3 : vector<1x128xf32> to vector<32x128xf32>
    %5 = arith.addf %2, %4 : vector<32x128xf32>
    %6 = vector.extract_strided_slice %5 {offsets = [0, 0], sizes = [32, 64], strides = [1, 1]} : vector<32x128xf32> to vector<32x64xf32>
    %7 = vector.extract_strided_slice %5 {offsets = [0, 64], sizes = [32, 64], strides = [1, 1]} : vector<32x128xf32> to vector<32x64xf32>
    %8 = math.absf %6 : vector<32x64xf32>
    %cst_5 = arith.constant 0.000000e+00 : f32
    %9 = vector.broadcast %cst_5 : f32 to vector<32x64xf32>
    %10 = arith.subf %9, %8 : vector<32x64xf32>
    %11 = math.exp %10 : vector<32x64xf32>
    %cst_6 = arith.constant 0.000000e+00 : f32
    %12 = vector.broadcast %cst_6 : f32 to vector<32x64xf32>
    %13 = arith.maximumf %6, %12 : vector<32x64xf32>
    %cst_7 = arith.constant 1.000000e+00 : f32
    %14 = vector.broadcast %cst_7 : f32 to vector<32x64xf32>
    %15 = arith.addf %14, %11 : vector<32x64xf32>
    %16 = math.log %15 : vector<32x64xf32>
    %17 = arith.addf %13, %16 : vector<32x64xf32>
    %c0_8 = arith.constant 0 : index
    %c0_9 = arith.constant 0 : index
    %18 = vector.load %arg4[%c0_8, %c0_9] : memref<32x64xf32, #tpu.memory_space<vmem>>, vector<32x64xf32>
    tpu.vector_store %arg4[%c0_8, %c0_9], %17 {strides = array<i32>} : memref<32x64xf32, #tpu.memory_space<vmem>>, vector<32x64xf32>,
    %19 = math.absf %7 : vector<32x64xf32>
    %cst_10 = arith.constant 0.000000e+00 : f32
    %20 = vector.broadcast %cst_10 : f32 to vector<32x64xf32>
    %21 = arith.subf %20, %19 : vector<32x64xf32>
    %22 = math.exp %21 : vector<32x64xf32>
    %cst_11 = arith.constant 0.000000e+00 : f32
    %23 = vector.broadcast %cst_11 : f32 to vector<32x64xf32>
    %24 = arith.cmpf oge, %7, %23 : vector<32x64xf32>
    %cst_12 = arith.constant 1.000000e+00 : f32
    %25 = vector.broadcast %cst_12 : f32 to vector<32x64xf32>
    %26 = arith.select %24, %25, %22 : vector<32x64xi1>, vector<32x64xf32>
    %cst_13 = arith.constant 1.000000e+00 : f32
    %27 = vector.broadcast %cst_13 : f32 to vector<32x64xf32>
    %28 = arith.addf %27, %22 : vector<32x64xf32>
    %29 = tpu.reciprocal %28 : vector<32x64xf32> -> vector<32x64xf32>
    %30 = arith.mulf %26, %29 : vector<32x64xf32>
    %c0_14 = arith.constant 0 : index
    %c0_15 = arith.constant 0 : index
    %31 = vector.load %arg5[%c0_14, %c0_15] : memref<32x64xf32, #tpu.memory_space<vmem>>, vector<32x64xf32>
    tpu.vector_store %arg5[%c0_14, %c0_15], %30 {strides = array<i32>} : memref<32x64xf32, #tpu.memory_space<vmem>>, vector<32x64xf32>,
    return
  }
  func.func @transform_0(%arg0: i32) -> (i32, i32) {
    %c0_i32 = arith.constant 0 : i32
    %c0_i32_0 = arith.constant 0 : i32
    return %arg0, %c0_i32 : i32, i32
  }
  func.func @transform_1(%arg0: i32) -> (i32, i32) {
    %c0_i32 = arith.constant 0 : i32
    %c0_i32_0 = arith.constant 0 : i32
    %c0_i32_1 = arith.constant 0 : i32
    return %c0_i32, %c0_i32_0 : i32, i32
  }
  func.func @transform_2(%arg0: i32) -> (i32, i32) {
    %c0_i32 = arith.constant 0 : i32
    %c0_i32_0 = arith.constant 0 : i32
    %c0_i32_1 = arith.constant 0 : i32
    return %c0_i32, %c0_i32_0 : i32, i32
  }
  func.func @transform_3(%arg0: i32) -> (i32, i32) {
    %c0_i32 = arith.constant 0 : i32
    %c0_i32_0 = arith.constant 0 : i32
    return %arg0, %c0_i32 : i32, i32
  }
  func.func @transform_4(%arg0: i32) -> (i32, i32) {
    %c0_i32 = arith.constant 0 : i32
    %c0_i32_0 = arith.constant 0 : i32
    return %arg0, %c0_i32 : i32, i32
  }
}

</mosaic_0001>

<llo_original>
// kernel: gauss_norm_forward.1
$region0: #{gauss_norm_forward.1}
  #allocation0 [shape = 'u32[]', space=smem, size = 0x4, offset = 0x4, fixed_abs, tag = 'smem constant byte address 0x4 - core index']
  #allocation1 [shape = 'u32[144,128]{1,0:T(1,128)}', space=vmem, size = 0x12000, scoped, tag = 'internal scratch']
  %s0 = inlined_call_operand.hbm [shape: f32[32,32], index: 0, kind: input, shape index: {}]
  %s1 = inlined_call_operand.hbm [shape: f32[32,128], index: 1, kind: input, shape index: {}]
  %s2 = inlined_call_operand.vmem [shape: f32[1,128], index: 2, kind: input, shape index: {}]
  %s3 = inlined_call_operand.hbm [shape: f32[32,64], index: 3, kind: output, shape index: {0}]
  %s4 = inlined_call_operand.hbm [shape: f32[32,64], index: 4, kind: output, shape index: {1}]
  %5 = xla_tuple %s3, %s4
  %s6 = sld [smem:[#allocation0]]
  $region38: #{gauss_norm_forward.1} parent=0
    _
  %s8 = ssub.s32 1, %s6
  %s9 = scalar_select 0, %s8, %s6
  $region1: #{gauss_norm_forward.1} parent=0
    #allocation2 [shape = 'u8[16384]{0}', space=vmem, size = 0x4000, scoped, tag = 'input window, operand 0, single buffered']
    #allocation3 [shape = 's32[1]{0}', space=sflag, size = 0x4, scoped, tag = 'scoped memory for gauss_norm_forward.1']
    #allocation4 [shape = 's32[1]{0}', space=sflag, size = 0x4, scoped, tag = 'scoped memory for gauss_norm_forward.1']
    #allocation5 [shape = 'u8[16384]{0}', space=vmem, size = 0x4000, scoped, tag = 'input window, operand 1, single buffered']
    #allocation6 [shape = 's32[1]{0}', space=sflag, size = 0x4, scoped, tag = 'scoped memory for gauss_norm_forward.1']
    #allocation7 [shape = 'u8[16384]{0}', space=vmem, size = 0x4000, scoped, tag = 'output window, operand 0, single buffered']
    #allocation8 [shape = 'u8[16384]{0}', space=vmem, size = 0x4000, scoped, tag = 'output window, operand 1, single buffered']
    #allocation9 [shape = 's32[1]{0}', space=sflag, size = 0x4, scoped, tag = 'scoped memory for gauss_norm_forward.1']
    %10 = vsyncpa [#allocation3], 0
    %11 = vsyncpa [#allocation6], 0
    %12 = vsyncpa [#allocation4], 0
    %13 = vsyncpa [#allocation9], 0
    // Predicated region
    $region2: #{gauss_norm_forward.1} parent=1 // pred_check
      _
    $region3: #{gauss_norm_forward.1} parent=1 // pred_check_branch
      %15 = sbr.rel (0) target = $region5
    $region4: #{gauss_norm_forward.1} parent=1 // pred_region
      %s17 = ssub.s32 512, 512
      %18 = vsyncadd [#allocation3], %s17
      %s19 = sshll.u32 [#allocation2], 4
      %s20 = int_to_ptr.vmem [resolvable:$true] %s19
      %25 = dma.hbm_to_vmem [thread:$0]  %s0, 512, %s20, [#allocation3], 128, 128, 8
    $region5: #{gauss_norm_forward.1} parent=1 // pred_fallthru
      _
    // Predicated region
    $region6: #{gauss_norm_forward.1} parent=1 // pred_check
      _
    $region7: #{gauss_norm_forward.1} parent=1 // pred_check_branch
      %27 = sbr.rel (0) target = $region9
    $region8: #{gauss_norm_forward.1} parent=1 // pred_region
      %s29 = ssub.s32 512, 512
      %30 = vsyncadd [#allocation6], %s29
      %s31 = sshll.u32 [#allocation5], 4
      %s32 = int_to_ptr.vmem [resolvable:$true] %s31
      %37 = dma.hbm_to_vmem [thread:$0]  %s1, 512, %s32, [#allocation6], 128, 128, 8
    $region9: #{gauss_norm_forward.1} parent=1 // pred_fallthru
      _
    // Predicated region
    $region10: #{gauss_norm_forward.1} parent=1 // pred_check
      _
    $region11: #{gauss_norm_forward.1} parent=1 // pred_check_branch
      %39 = sbr.rel (0) target = $region13
    $region12: #{gauss_norm_forward.1} parent=1 // pred_region
      _
    $region13: #{gauss_norm_forward.1} parent=1 // pred_fallthru
      _
    // Predicated region
    $region14: #{gauss_norm_forward.1} parent=1 // pred_check
      _
    $region15: #{gauss_norm_forward.1} parent=1 // pred_check_branch
      %41 = sbr.rel (0) target = $region17
    $region16: #{gauss_norm_forward.1} parent=1 // pred_region
      %42 = dma.done [#allocation3], 512
    $region17: #{gauss_norm_forward.1} parent=1 // pred_fallthru
      _
    // Predicated region
    $region18: #{gauss_norm_forward.1} parent=1 // pred_check
      _
    $region19: #{gauss_norm_forward.1} parent=1 // pred_check_branch
      %44 = sbr.rel (0) target = $region21
    $region20: #{gauss_norm_forward.1} parent=1 // pred_region
      %45 = dma.done [#allocation6], 512
    $region21: #{gauss_norm_forward.1} parent=1 // pred_fallthru
      _
    %v46 = vld [vmem:[#allocation2] sm:$0xff]
    %v47 = vld [vmem:[#allocation2 + $0x8] sm:$0xff]
    %v48 = vld [vmem:[#allocation2 + $0x10] sm:$0xff]
    %v49 = vld [vmem:[#allocation2 + $0x18] sm:$0xff]
    %v50 = vld [vmem:[#allocation5] sm:$0xff]
    %v51 = vld [vmem:[#allocation5 + $0x8] sm:$0xff]
    %v52 = vld [vmem:[#allocation5 + $0x10] sm:$0xff]
    %v53 = vld [vmem:[#allocation5 + $0x18] sm:$0xff]
    %v54 = vld [vmem:[%s2] sm:$0x1]
    %v56 = vlaneseq
    %v57 = vshrl.u32 %v56, 7
    %v58 = vsub.s32 0, %v57
    %v59 = vrot.slane %v54, %v58
    %vm61 = vcmask 261120
    %v63 = vsel %vm61, %v46, 0
    %v66 = vsel %vm61, %v47, 0
    %v69 = vsel %vm61, %v48, 0
    %v72 = vsel %vm61, %v49, 0
    %74 = vmatprep.subr.mxu0 0.0
    %75 = vmatpush1.msra.mxu0 0.0
    %76 = vmatprep.subr.mxu0 0.0
    %77 = vmatpush1.msra.mxu0 0.0
    %78 = vmatprep.subr.mxu0 0.0
    %79 = vmatpush1.msra.mxu0 0.0
    %80 = vmatprep.subr.mxu0 0.0
    %81 = vmatpush1.msra.mxu0 0.0
    %82 = vmatprep.subr.mxu0 0.0
    %83 = vmatpush1.msra.mxu0 0.0
    %84 = vmatprep.subr.mxu0 0.0
    %85 = vmatpush1.msra.mxu0 0.0
    %86 = vmatprep.subr.mxu0 0.0
    %87 = vmatpush1.msra.mxu0 0.0
    %88 = vmatprep.subr.mxu0 0.0
    %89 = vmatpush1.msra.mxu0 0.0
    %90 = vmatprep.subr.mxu0 0.0
    %91 = vmatpush1.msra.mxu0 0.0
    %92 = vmatprep.subr.mxu0 0.0
    %93 = vmatpush1.msra.mxu0 0.0
    %94 = vmatprep.subr.mxu0 0.0
    %95 = vmatpush1.msra.mxu0 0.0
    %96 = vmatprep.subr.mxu0 0.0
    %97 = vmatpush1.msra.mxu0 0.0
    %98 = vmatprep.subr.mxu0 0.0
    %99 = vmatpush1.msra.mxu0 %v53
    %100 = vmatprep.subr.mxu0 0.0
    %101 = vmatpush1.msra.mxu0 %v52
    %102 = vmatprep.subr.mxu0 0.0
    %103 = vmatpush1.msra.mxu0 %v51
    %104 = vmatprep.subr.mxu0 0.0
    %105 = vmatpush1.msra.mxu0 %v50
    %106 = vmatprep.subr.mxu0 0.0
    %107 = vmatpush2.msra.mxu0 0.0
    %108 = vmatprep.subr.mxu0 0.0
    %109 = vmatpush2.msra.mxu0 0.0
    %110 = vmatprep.subr.mxu0 0.0
    %111 = vmatpush2.msra.mxu0 0.0
    %112 = vmatprep.subr.mxu0 0.0
    %113 = vmatpush2.msra.mxu0 0.0
    %114 = vmatprep.subr.mxu0 0.0
    %115 = vmatpush2.msra.mxu0 0.0
    %116 = vmatprep.subr.mxu0 0.0
    %117 = vmatpush2.msra.mxu0 0.0
    %118 = vmatprep.subr.mxu0 0.0
    %119 = vmatpush2.msra.mxu0 0.0
    %120 = vmatprep.subr.mxu0 0.0
    %121 = vmatpush2.msra.mxu0 0.0
    %122 = vmatprep.subr.mxu0 0.0
    %123 = vmatpush2.msra.mxu0 0.0
    %124 = vmatprep.subr.mxu0 0.0
    %125 = vmatpush2.msra.mxu0 0.0
    %126 = vmatprep.subr.mxu0 0.0
    %127 = vmatpush2.msra.mxu0 0.0
    %128 = vmatprep.subr.mxu0 0.0
    %129 = vmatpush2.msra.mxu0 0.0
    %130 = vmatprep.subr.mxu0 0.0
    %131 = vmatpush2.msra.mxu0 0.0
    %132 = vmatprep.subr.mxu0 0.0
    %133 = vmatpush2.msra.mxu0 0.0
    %134 = vmatprep.subr.mxu0 0.0
    %135 = vmatpush2.msra.mxu0 0.0
    %136 = vmatprep.subr.mxu0 0.0
    %137 = vmatpush2.msra.mxu0 0.0
    %138 = vmatprep.mubr.f32.mxu0 0.0
    %139 = vmatmul.mubr.f32.gmra.mxu0 %v63
    %v140 = vpop.f32.mrf.mxu0
    %v141 = vadd.f32 %v59, %v140
    %v142 = vpop.f32.mrf.mxu0
    %143 = vmatprep.mubr.f32.mxu0 0.0
    %144 = vmatmul.mubr.f32.gmra.mxu0 %v66
    %v145 = vpop.f32.mrf.mxu0
    %v146 = vadd.f32 %v59, %v145
    %v147 = vpop.f32.mrf.mxu0
    %148 = vmatprep.mubr.f32.mxu0 0.0
    %149 = vmatmul.mubr.f32.gmra.mxu0 %v69
    %v150 = vpop.f32.mrf.mxu0
    %v151 = vadd.f32 %v59, %v150
    %v152 = vpop.f32.mrf.mxu0
    %153 = vmatprep.mubr.f32.mxu0 0.0
    %154 = vmatmul.mubr.f32.gmra.mxu0 %v72
    %v155 = vpop.f32.mrf.mxu0
    %v156 = vadd.f32 %v59, %v155
    %v157 = vpop.f32.mrf.mxu0
    %158 = vdwg.mxu0
    %v159 = vand.u32 2147483647, %v141
    %v160 = vand.u32 2147483647, %v146
    %v161 = vand.u32 2147483647, %v151
    %v162 = vand.u32 2147483647, %v156
    %v163 = vsub.f32 0.0, %v159
    %v164 = vsub.f32 0.0, %v160
    %v165 = vsub.f32 0.0, %v161
    %v166 = vsub.f32 0.0, %v162
    %v167 = vmul.f32 %v163, 1.442695
    %v168 = vpow.pop %v167
    %v169 = vmul.f32 %v164, 1.442695
    %v170 = vpow.pop %v169
    %v171 = vmul.f32 %v165, 1.442695
    %v172 = vpow.pop %v171
    %v173 = vmul.f32 %v166, 1.442695
    %v174 = vpow.pop %v173
    %v175 = vmax.f32 %v141, 0.0
    %v176 = vmax.f32 %v146, 0.0
    %v177 = vmax.f32 %v151, 0.0
    %v178 = vmax.f32 %v156, 0.0
    %v179 = vadd.f32 %v168, 1.0
    %v180 = vadd.f32 %v170, 1.0
    %v181 = vadd.f32 %v172, 1.0
    %v182 = vadd.f32 %v174, 1.0
    %v183 = vlog2.pop %v179
    %v184 = vmul.f32 %v183, 0.6931472
    %v185 = vlog2.pop %v180
    %v186 = vmul.f32 %v185, 0.6931472
    %v187 = vlog2.pop %v181
    %v188 = vmul.f32 %v187, 0.6931472
    %v189 = vlog2.pop %v182
    %v190 = vmul.f32 %v189, 0.6931472
    %v191 = vadd.f32 %v175, %v184
    %v192 = vadd.f32 %v176, %v186
    %v193 = vadd.f32 %v177, %v188
    %v194 = vadd.f32 %v178, %v190
    %vm195 = vcmask 523264
    %196 = vst.msk [vmem:[#allocation7] sm:$0xff] %vm195, %v191
    %197 = vst.msk [vmem:[#allocation7 + $0x8] sm:$0xff] %vm195, %v192
    %198 = vst.msk [vmem:[#allocation7 + $0x10] sm:$0xff] %vm195, %v193
    %199 = vst.msk [vmem:[#allocation7 + $0x18] sm:$0xff] %vm195, %v194
    %vm200 = vcmp.ge.f32.partialorder %v141, 0.0
    %vm201 = vcmp.ge.f32.partialorder %v146, 0.0
    %vm202 = vcmp.ge.f32.partialorder %v151, 0.0
    %vm203 = vcmp.ge.f32.partialorder %v156, 0.0
    %v204 = vsel %vm200, 1.0, %v168
    %v205 = vsel %vm201, 1.0, %v170
    %v206 = vsel %vm202, 1.0, %v172
    %v207 = vsel %vm203, 1.0, %v174
    %v208 = vrcp.pop %v179
    %v209 = vrcp.pop %v180
    %v210 = vrcp.pop %v181
    %v211 = vrcp.pop %v182
    %v212 = vmul.f32 %v204, %v208
    %v213 = vmul.f32 %v205, %v209
    %v214 = vmul.f32 %v206, %v210
    %v215 = vmul.f32 %v207, %v211
    %220 = vrot.lane.b32.xlu0 %v212, 64
    %v221 = vpop.permute.xlu0 %220
    %222 = vrot.lane.b32.xlu0 %v213, 64
    %v223 = vpop.permute.xlu0 %222
    %224 = vrot.lane.b32.xlu0 %v214, 64
    %v225 = vpop.permute.xlu0 %224
    %226 = vrot.lane.b32.xlu0 %v215, 64
    %v227 = vpop.permute.xlu0 %226
    %232 = vst.msk [vmem:[#allocation8] sm:$0xff] %vm195, %v221
    %233 = vst.msk [vmem:[#allocation8 + $0x8] sm:$0xff] %vm195, %v223
    %234 = vst.msk [vmem:[#allocation8 + $0x10] sm:$0xff] %vm195, %v225
    %235 = vst.msk [vmem:[#allocation8 + $0x18] sm:$0xff] %vm195, %v227
    // Predicated region
    $region22: #{gauss_norm_forward.1} parent=1 // pred_check
      _
    $region23: #{gauss_norm_forward.1} parent=1 // pred_check_branch
      %237 = sbr.rel (0) target = $region25
    $region24: #{gauss_norm_forward.1} parent=1 // pred_region
      %s239 = ssub.s32 512, 512
      %240 = vsyncadd [#allocation4], %s239
      %s241 = sshll.u32 [#allocation7], 4
      %s242 = int_to_ptr.vmem [resolvable:$true] %s241
      %247 = dma.vmem_to_hbm [thread:$0]  %s242, 512, %s3, [#allocation4], 128, 128, 8
    $region25: #{gauss_norm_forward.1} parent=1 // pred_fallthru
      _
    // Predicated region
    $region26: #{gauss_norm_forward.1} parent=1 // pred_check
      _
    $region27: #{gauss_norm_forward.1} parent=1 // pred_check_branch
      %249 = sbr.rel (0) target = $region29
    $region28: #{gauss_norm_forward.1} parent=1 // pred_region
      %s251 = ssub.s32 512, 512
      %252 = vsyncadd [#allocation9], %s251
      %s253 = sshll.u32 [#allocation8], 4
      %s254 = int_to_ptr.vmem [resolvable:$true] %s253
      %259 = dma.vmem_to_hbm [thread:$0]  %s254, 512, %s4, [#allocation9], 128, 128, 8
    $region29: #{gauss_norm_forward.1} parent=1 // pred_fallthru
      _
    // Predicated region
    $region30: #{gauss_norm_forward.1} parent=1 // pred_check
      _
    $region31: #{gauss_norm_forward.1} parent=1 // pred_check_branch
      %261 = sbr.rel (0) target = $region33
    $region32: #{gauss_norm_forward.1} parent=1 // pred_region
      %262 = dma.done [#allocation4], 512
    $region33: #{gauss_norm_forward.1} parent=1 // pred_fallthru
      _
    // Predicated region
    $region34: #{gauss_norm_forward.1} parent=1 // pred_check
      _
    $region35: #{gauss_norm_forward.1} parent=1 // pred_check_branch
      %264 = sbr.rel (0) target = $region37
    $region36: #{gauss_norm_forward.1} parent=1 // pred_region
      %265 = dma.done [#allocation9], 512
    $region37: #{gauss_norm_forward.1} parent=1 // pred_fallthru
      _
    %266 = vsyncpa [#allocation3], 1
    %267 = vsyncpa [#allocation6], 1
    %268 = vsyncpa [#allocation4], 1
    %269 = vsyncpa [#allocation9], 1

</llo_original>
